<compile_context>
chip_gen: v7x
topology: tpu7x:2x2x1
jax: 0.10.0
libtpu: 0.0.40
codegen_flags: <defaults>
</compile_context>

<pallas_src>
import functools

import jax
import jax.numpy as jnp
from jax.experimental import pallas as pl
from jax.experimental.pallas import tpu as pltpu


def _attention_kernel(x_ref, w_ref, o_ref, m_ref, l_ref, acc_ref, *,
                      seq_len, seq_block, use_mxu_scores):
    # x_ref:   (TB, TS, H)  slab of lstm_output
    # w_ref:   (1, 1, H)    attention weight row (x dtype)
    # o_ref:   (TB, 1, H)   pooled output block (written on the last seq step)
    # m_ref:   (TB, 1, 1)   running max          (f32 scratch)
    # l_ref:   (TB, 1, 1)   running denominator  (f32 scratch)
    # acc_ref: (TB, 1, H)   running weighted sum (f32 scratch)
    k = pl.program_id(1)

    @pl.when(k == 0)
    def _():
        m_ref[...] = jnp.full_like(m_ref, -jnp.inf)
        l_ref[...] = jnp.zeros_like(l_ref)
        acc_ref[...] = jnp.zeros_like(acc_ref)

    x = x_ref[...]                                        # (TB, TS, H)
    w = w_ref[...]                                        # (1, 1, H)
    tb, ts, h = x.shape

    if seq_len % seq_block != 0:
        # Tail seq block: zero out-of-range rows of x so garbage can never
        # reach the accumulator (their scores are forced to -inf below).
        row = jax.lax.broadcasted_iota(jnp.int32, (1, ts, 1), 1)
        x = jnp.where((k * seq_block + row) < seq_len, x, jnp.zeros_like(x))

    # Attention scores with the seq axis on lanes: (TB, 1, TS), f32.
    if use_mxu_scores:
        # Batched matvec on the MXU (idle in this mem-bound kernel).
        wb = jnp.broadcast_to(w, (tb, 1, h)).astype(x.dtype)
        s = jnp.einsum("boh,bsh->bos", wb, x,
                       preferred_element_type=jnp.float32)
    else:
        # VPU lane multiply + reduce (wide f32 hidden dims).
        s = jnp.sum(x.astype(jnp.float32) * w.astype(jnp.float32),
                    axis=-1)[:, None, :]

    if seq_len % seq_block != 0:
        lane = jax.lax.broadcasted_iota(jnp.int32, (1, 1, ts), 2)
        s = jnp.where((k * seq_block + lane) < seq_len, s, -jnp.inf)

    # Online softmax update; normalization deferred to the final seq step.
    m_prev = m_ref[...]                                   # (TB, 1, 1)
    m_new = jnp.maximum(m_prev, jnp.max(s, axis=-1, keepdims=True))
    alpha = jnp.exp(m_prev - m_new)                       # (TB, 1, 1)
    p = jnp.exp(s - m_new)                                # (TB, 1, TS)
    l_ref[...] = alpha * l_ref[...] + jnp.sum(p, axis=-1, keepdims=True)
    acc_ref[...] = alpha * acc_ref[...] + jnp.einsum(
        "bos,bsh->boh", p.astype(x.dtype), x,
        preferred_element_type=jnp.float32)               # (TB, 1, H)
    m_ref[...] = m_new

    @pl.when(k == pl.num_programs(1) - 1)
    def _():
        inv = pl.reciprocal(l_ref[...], approx=False)     # (TB, 1, 1)
        o_ref[...] = (acc_ref[...] * inv).astype(o_ref.dtype)


def attention_forward(lstm_output, weight, bias=None, *,
                      target_block_bytes=8 << 20):
    """lstm_output: (B, S, H); weight: (1, H) or (H,) (PyTorch Linear layout);
    bias: (1,) -- ignored inside the kernel (softmax over seq is shift-invariant)."""
    del bias  # exact: '+ b' cancels under softmax over the sequence axis
    B, S, H = lstm_output.shape
    dtype = lstm_output.dtype
    itemsize = jnp.dtype(dtype).itemsize

    # MXU scores unless the hidden dim is wide enough for the VPU lane reduce
    # to amortize AND x is f32 (v5e has no bf16 VALU; narrow H hurts v7x/v6e XLU).
    use_mxu_scores = (dtype != jnp.float32) or (H < 512)
    w = jnp.asarray(weight).astype(dtype).reshape(1, 1, H)

    # --- block sizing (no HBM copies of x: we only pick block shapes) --------
    row_bytes = S * H * itemsize                      # one (1, S, H) batch row
    tb = int(max(1, min(B, target_block_bytes // max(row_bytes, 1))))
    if tb < B:
        tb = max(8, (tb // 8) * 8)                    # sublane-friendly batch block
    # v7x megacore: keep >= 2 steps on the "parallel" batch axis when B allows
    # it without breaking the 8-row alignment (v5e/v6e: single TC, no effect).
    if B >= 16 and tb > (B + 1) // 2:
        tb = max(8, (((B + 1) // 2) // 8) * 8)
    tb = min(tb, B)

    # Sequence tile: bound the per-step slab by the byte budget. This (not the
    # batch block) is what keeps double-buffered VMEM usage in check, so the
    # tb >= 8 rounding above can never blow past VMEM.
    if tb * row_bytes <= target_block_bytes:
        ts = S
    else:
        ts = int(target_block_bytes // max(tb * H * itemsize, 1))
        ts = min(S, max(8, (ts // 8) * 8))

    grid = (pl.cdiv(B, tb), pl.cdiv(S, ts))

    kernel = functools.partial(
        _attention_kernel, seq_len=S, seq_block=ts,
        use_mxu_scores=use_mxu_scores)

    out = pl.pallas_call(
        kernel,
        out_shape=jax.ShapeDtypeStruct((B, 1, H), dtype),
        grid_spec=pltpu.PrefetchScalarGridSpec(
            num_scalar_prefetch=0,
            grid=grid,
            in_specs=[
                pl.BlockSpec((tb, ts, H), lambda b, k: (b, k, 0)),
                pl.BlockSpec((1, 1, H), lambda b, k: (0, 0, 0)),
            ],
            out_specs=pl.BlockSpec((tb, 1, H), lambda b, k: (b, 0, 0)),
            scratch_shapes=[
                pltpu.VMEM((tb, 1, 1), jnp.float32),   # running max
                pltpu.VMEM((tb, 1, 1), jnp.float32),   # running denominator
                pltpu.VMEM((tb, 1, H), jnp.float32),   # weighted-sum accumulator
            ],
        ),
        compiler_params=pltpu.CompilerParams(
            dimension_semantics=("parallel", "arbitrary"),
            vmem_limit_bytes=48 * 1024 * 1024,
        ),
    )(lstm_output, w)

    return out[:, 0, :]


def attention_reference(lstm_output, weight, bias):
    """Pure-JAX reference mirroring the PyTorch forward exactly (bias included)."""
    scores = jnp.einsum("bsh,oh->bso", lstm_output, weight) + bias  # (B, S, 1)
    attn = jax.nn.softmax(scores, axis=1)                           # (B, S, 1)
    return jnp.sum(lstm_output * attn, axis=1)                      # (B, H)


if __name__ == "__main__":
    key = jax.random.PRNGKey(0)
    B, S, H = 2, 8, 32  # batch, seq, hidden_dim

    k_x, k_w, k_b = jax.random.split(key, 3)
    lstm_output = jax.random.normal(k_x, (B, S, H), dtype=jnp.float32)
    # nn.Linear(hidden_dim, 1): weight shape (1, H), bias shape (1,)
    weight = jax.random.normal(k_w, (1, H), dtype=jnp.float32) * 0.1
    bias = jax.random.normal(k_b, (1,), dtype=jnp.float32) * 0.1

    out = attention_forward(lstm_output, weight, bias)
    out = jax.block_until_ready(out)

    ref = attention_reference(lstm_output, weight, bias)
    assert out.shape == (B, H)
    assert jnp.allclose(out, ref, atol=1e-5, rtol=1e-5), "mismatch vs reference"

    print("KERNEL_OK")
</pallas_src>

<mosaic_0001>
module attributes {stable_mosaic.version = 11 : i64} {
  func.func @_attention_kernel(%arg0: i32, %arg1: i32, %arg2: memref<2x8x32xf32, #tpu.memory_space<vmem>>, %arg3: memref<1x1x32xf32, #tpu.memory_space<vmem>>, %arg4: memref<2x1x32xf32, #tpu.memory_space<vmem>>, %arg5: memref<2x1x1xf32, #tpu.memory_space<vmem>>, %arg6: memref<2x1x1xf32, #tpu.memory_space<vmem>>, %arg7: memref<2x1x32xf32, #tpu.memory_space<vmem>>) attributes {dimension_semantics = [#tpu.dimension_semantics<parallel>, #tpu.dimension_semantics<arbitrary>], iteration_bounds = array<i64: 1, 1>, scalar_prefetch = 0 : i64, scratch_operands = 3 : i64, tpu.core_type = #tpu.core_type<tc>, window_params = [{transform_indices = @transform_0, window_bounds = array<i64: 2, 8, 32>}, {pipeline_mode = #tpu.pipeline_mode<synchronous>, transform_indices = @transform_1, window_bounds = array<i64: 1, 1, 32>}, {transform_indices = @transform_2, window_bounds = array<i64: 2, 1, 32>}]} {
    %c0_i32 = arith.constant 0 : i32
    %0 = arith.cmpi eq, %arg1, %c0_i32 : i32
    %1 = arith.extui %0 : i1 to i32
    %c0_i32_0 = arith.constant 0 : i32
    %2 = arith.cmpi ne, %1, %c0_i32_0 : i32
    scf.if %2 {
      %cst_29 = arith.constant 0xFF800000 : f32
      %33 = vector.broadcast %cst_29 : f32 to vector<2x1x1xf32>
      %c0_30 = arith.constant 0 : index
      %c0_31 = arith.constant 0 : index
      %c0_32 = arith.constant 0 : index
      %34 = vector.load %arg5[%c0_30, %c0_31, %c0_32] : memref<2x1x1xf32, #tpu.memory_space<vmem>>, vector<2x1x1xf32>
      tpu.vector_store %arg5[%c0_30, %c0_31, %c0_32], %33 {strides = array<i32>} : memref<2x1x1xf32, #tpu.memory_space<vmem>>, vector<2x1x1xf32>,
      %cst_33 = arith.constant 0.000000e+00 : f32
      %35 = vector.broadcast %cst_33 : f32 to vector<2x1x1xf32>
      %c0_34 = arith.constant 0 : index
      %c0_35 = arith.constant 0 : index
      %c0_36 = arith.constant 0 : index
      %36 = vector.load %arg6[%c0_34, %c0_35, %c0_36] : memref<2x1x1xf32, #tpu.memory_space<vmem>>, vector<2x1x1xf32>
      tpu.vector_store %arg6[%c0_34, %c0_35, %c0_36], %35 {strides = array<i32>} : memref<2x1x1xf32, #tpu.memory_space<vmem>>, vector<2x1x1xf32>,
      %cst_37 = arith.constant 0.000000e+00 : f32
      %37 = vector.broadcast %cst_37 : f32 to vector<2x1x32xf32>
      %c0_38 = arith.constant 0 : index
      %c0_39 = arith.constant 0 : index
      %c0_40 = arith.constant 0 : index
      %38 = vector.load %arg7[%c0_38, %c0_39, %c0_40] : memref<2x1x32xf32, #tpu.memory_space<vmem>>, vector<2x1x32xf32>
      tpu.vector_store %arg7[%c0_38, %c0_39, %c0_40], %37 {strides = array<i32>} : memref<2x1x32xf32, #tpu.memory_space<vmem>>, vector<2x1x32xf32>,
    } else {
    }
    %c0 = arith.constant 0 : index
    %c0_1 = arith.constant 0 : index
    %c0_2 = arith.constant 0 : index
    %3 = vector.load %arg2[%c0, %c0_1, %c0_2] : memref<2x8x32xf32, #tpu.memory_space<vmem>>, vector<2x8x32xf32>
    %c0_3 = arith.constant 0 : index
    %c0_4 = arith.constant 0 : index
    %c0_5 = arith.constant 0 : index
    %4 = vector.load %arg3[%c0_3, %c0_4, %c0_5] : memref<1x1x32xf32, #tpu.memory_space<vmem>>, vector<1x1x32xf32>
    %5 = vector.shape_cast %4 : vector<1x1x32xf32> to vector<1x1x32xf32>
    %6 = vector.broadcast %5 : vector<1x1x32xf32> to vector<2x1x32xf32>
    "tpu.trace_start"() <{level = 10 : i32, message = "boh,bsh->bos"}> : () -> ()
    %cst = arith.constant dense<0.000000e+00> : vector<2x1x8xf32>
    %7 = tpu.matmul %6, %3, %cst {dimension_numbers = #tpu.dot_dimension_numbers<[2], [2], [1], [1], [0, 0, 0, 1, 1, 1], [0], [0]>} : vector<2x1x32xf32>, vector<2x8x32xf32>, vector<2x1x8xf32> -> vector<2x1x8xf32>
    "tpu.trace_stop"() : () -> ()
    %c0_6 = arith.constant 0 : index
    %c0_7 = arith.constant 0 : index
    %c0_8 = arith.constant 0 : index
    %8 = vector.load %arg5[%c0_6, %c0_7, %c0_8] : memref<2x1x1xf32, #tpu.memory_space<vmem>>, vector<2x1x1xf32>
    %cst_9 = arith.constant dense<0xFF800000> : vector<2x1xf32>
    %9 = vector.multi_reduction <maximumf>, %7, %cst_9 [2] : vector<2x1x8xf32> to vector<2x1xf32>
    %10 = vector.shape_cast %9 : vector<2x1xf32> to vector<2x1x1xf32>
    %11 = arith.maximumf %8, %10 : vector<2x1x1xf32>
    %12 = arith.subf %8, %11 : vector<2x1x1xf32>
    %13 = math.exp %12 : vector<2x1x1xf32>
    %14 = vector.broadcast %11 : vector<2x1x1xf32> to vector<2x1x8xf32>
    %15 = arith.subf %7, %14 : vector<2x1x8xf32>
    %16 = math.exp %15 : vector<2x1x8xf32>
    %c0_10 = arith.constant 0 : index
    %c0_11 = arith.constant 0 : index
    %c0_12 = arith.constant 0 : index
    %17 = vector.load %arg6[%c0_10, %c0_11, %c0_12] : memref<2x1x1xf32, #tpu.memory_space<vmem>>, vector<2x1x1xf32>
    %18 = arith.mulf %13, %17 : vector<2x1x1xf32>
    %cst_13 = arith.constant dense<0.000000e+00> : vector<2x1xf32>
    %19 = vector.multi_reduction <add>, %16, %cst_13 [2] : vector<2x1x8xf32> to vector<2x1xf32>
    %20 = vector.shape_cast %19 : vector<2x1xf32> to vector<2x1x1xf32>
    %21 = arith.addf %18, %20 : vector<2x1x1xf32>
    %c0_14 = arith.constant 0 : index
    %c0_15 = arith.constant 0 : index
    %c0_16 = arith.constant 0 : index
    %22 = vector.load %arg6[%c0_14, %c0_15, %c0_16] : memref<2x1x1xf32, #tpu.memory_space<vmem>>, vector<2x1x1xf32>
    tpu.vector_store %arg6[%c0_14, %c0_15, %c0_16], %21 {strides = array<i32>} : memref<2x1x1xf32, #tpu.memory_space<vmem>>, vector<2x1x1xf32>,
    %c0_17 = arith.constant 0 : index
    %c0_18 = arith.constant 0 : index
    %c0_19 = arith.constant 0 : index
    %23 = vector.load %arg7[%c0_17, %c0_18, %c0_19] : memref<2x1x32xf32, #tpu.memory_space<vmem>>, vector<2x1x32xf32>
    %24 = vector.broadcast %13 : vector<2x1x1xf32> to vector<2x1x32xf32>
    %25 = arith.mulf %24, %23 : vector<2x1x32xf32>
    "tpu.trace_start"() <{level = 10 : i32, message = "bos,bsh->boh"}> : () -> ()
    %cst_20 = arith.constant dense<0.000000e+00> : vector<2x1x32xf32>
    %26 = tpu.matmul %16, %3, %cst_20 {dimension_numbers = #tpu.dot_dimension_numbers<[2], [1], [1], [2], [0, 0, 0, 1, 1, 2], [0], [0]>} : vector<2x1x8xf32>, vector<2x8x32xf32>, vector<2x1x32xf32> -> vector<2x1x32xf32>
    "tpu.trace_stop"() : () -> ()
    %27 = arith.addf %25, %26 : vector<2x1x32xf32>
    %c0_21 = arith.constant 0 : index
    %c0_22 = arith.constant 0 : index
    %c0_23 = arith.constant 0 : index
    %28 = vector.load %arg7[%c0_21, %c0_22, %c0_23] : memref<2x1x32xf32, #tpu.memory_space<vmem>>, vector<2x1x32xf32>
    tpu.vector_store %arg7[%c0_21, %c0_22, %c0_23], %27 {strides = array<i32>} : memref<2x1x32xf32, #tpu.memory_space<vmem>>, vector<2x1x32xf32>,
    %c0_24 = arith.constant 0 : index
    %c0_25 = arith.constant 0 : index
    %c0_26 = arith.constant 0 : index
    %29 = vector.load %arg5[%c0_24, %c0_25, %c0_26] : memref<2x1x1xf32, #tpu.memory_space<vmem>>, vector<2x1x1xf32>
    tpu.vector_store %arg5[%c0_24, %c0_25, %c0_26], %11 {strides = array<i32>} : memref<2x1x1xf32, #tpu.memory_space<vmem>>, vector<2x1x1xf32>,
    %c0_i32_27 = arith.constant 0 : i32
    %30 = arith.cmpi eq, %arg1, %c0_i32_27 : i32
    %31 = arith.extui %30 : i1 to i32
    %c0_i32_28 = arith.constant 0 : i32
    %32 = arith.cmpi ne, %31, %c0_i32_28 : i32
    scf.if %32 {
      %c0_29 = arith.constant 0 : index
      %c0_30 = arith.constant 0 : index
      %c0_31 = arith.constant 0 : index
      %33 = vector.load %arg6[%c0_29, %c0_30, %c0_31] : memref<2x1x1xf32, #tpu.memory_space<vmem>>, vector<2x1x1xf32>
      %34 = tpu.reciprocal %33 : vector<2x1x1xf32> -> vector<2x1x1xf32>
      %c0_32 = arith.constant 0 : index
      %c0_33 = arith.constant 0 : index
      %c0_34 = arith.constant 0 : index
      %35 = vector.load %arg7[%c0_32, %c0_33, %c0_34] : memref<2x1x32xf32, #tpu.memory_space<vmem>>, vector<2x1x32xf32>
      %36 = vector.broadcast %34 : vector<2x1x1xf32> to vector<2x1x32xf32>
      %37 = arith.mulf %35, %36 : vector<2x1x32xf32>
      %c0_35 = arith.constant 0 : index
      %c0_36 = arith.constant 0 : index
      %c0_37 = arith.constant 0 : index
      %38 = vector.load %arg4[%c0_35, %c0_36, %c0_37] : memref<2x1x32xf32, #tpu.memory_space<vmem>>, vector<2x1x32xf32>
      tpu.vector_store %arg4[%c0_35, %c0_36, %c0_37], %37 {strides = array<i32>} : memref<2x1x32xf32, #tpu.memory_space<vmem>>, vector<2x1x32xf32>,
    } else {
    }
    return
  }
  func.func @transform_0(%arg0: i32, %arg1: i32) -> (i32, i32, i32) {
    %c0_i32 = arith.constant 0 : i32
    %c0_i32_0 = arith.constant 0 : i32
    return %arg0, %arg1, %c0_i32 : i32, i32, i32
  }
  func.func @transform_1(%arg0: i32, %arg1: i32) -> (i32, i32, i32) {
    %c0_i32 = arith.constant 0 : i32
    %c0_i32_0 = arith.constant 0 : i32
    %c0_i32_1 = arith.constant 0 : i32
    %c0_i32_2 = arith.constant 0 : i32
    return %c0_i32, %c0_i32_0, %c0_i32_1 : i32, i32, i32
  }
  func.func @transform_2(%arg0: i32, %arg1: i32) -> (i32, i32, i32) {
    %c0_i32 = arith.constant 0 : i32
    %c0_i32_0 = arith.constant 0 : i32
    %c0_i32_1 = arith.constant 0 : i32
    return %arg0, %c0_i32, %c0_i32_0 : i32, i32, i32
  }
}

</mosaic_0001>

<llo_original>
// kernel: tpu_custom_call.1
$region0: #{tpu_custom_call.1}
  #allocation0 [shape = 'u32[]', space=smem, size = 0x4, offset = 0x4, fixed_abs, tag = 'smem constant byte address 0x4 - core index']
  #allocation1 [shape = 'u32[144,128]{1,0:T(1,128)}', space=vmem, size = 0x12000, scoped, tag = 'internal scratch']
  #allocation2 [shape = 'f32[2,1,1]{2,1,0:T(1,128)}', space=vmem, size = 0x400, scoped, tag = 'scratch operand']
  #allocation3 [shape = 'f32[2,1,1]{2,1,0:T(1,128)}', space=vmem, size = 0x400, scoped, tag = 'scratch operand']
  #allocation4 [shape = 'f32[2,1,32]{2,1,0:T(1,128)}', space=vmem, size = 0x400, scoped, tag = 'scratch operand']
  %s0 = inlined_call_operand.hbm [shape: f32[2,8,32], index: 0, kind: input, shape index: {}]
  %s1 = inlined_call_operand.vmem [shape: f32[1,1,32], index: 1, kind: input, shape index: {}]
  %s2 = inlined_call_operand.hbm [shape: f32[2,1,32], index: 2, kind: output, shape index: {}]
  %s3 = sld [smem:[#allocation0]]
  $region30: #{tpu_custom_call.1} parent=0
    _
  %s5 = ssub.s32 1, %s3
  %s6 = scalar_select 0, %s5, %s3
  $region1: #{tpu_custom_call.1} parent=0
    #allocation5 [shape = 'u8[8192]{0}', space=vmem, size = 0x2000, scoped, tag = 'input window, operand 0, single buffered']
    #allocation6 [shape = 's32[1]{0}', space=sflag, size = 0x4, scoped, tag = 'scoped memory for tpu_custom_call.1']
    #allocation7 [shape = 's32[1]{0}', space=sflag, size = 0x4, scoped, tag = 'scoped memory for tpu_custom_call.1']
    #allocation8 [shape = 'u8[1024]{0}', space=vmem, size = 0x400, scoped, tag = 'output window, operand 0, single buffered']
    %7 = vsyncpa [#allocation6], 0
    %8 = vsyncpa [#allocation7], 0
    // Predicated region
    $region2: #{tpu_custom_call.1} parent=1 // pred_check
      _
    $region3: #{tpu_custom_call.1} parent=1 // pred_check_branch
      %10 = sbr.rel (0) target = $region5
    $region4: #{tpu_custom_call.1} parent=1 // pred_region
      %s12 = ssub.s32 256, 256
      %13 = vsyncadd [#allocation6], %s12
      %s14 = sshll.u32 [#allocation5], 4
      %s15 = int_to_ptr.vmem [resolvable:$true] %s14
      %20 = dma.hbm_to_vmem [thread:$0]  %s0, 256, %s15, [#allocation6], 128, 128, 8
    $region5: #{tpu_custom_call.1} parent=1 // pred_fallthru
      _
    // Predicated region
    $region6: #{tpu_custom_call.1} parent=1 // pred_check
      _
    $region7: #{tpu_custom_call.1} parent=1 // pred_check_branch
      %22 = sbr.rel (0) target = $region9
    $region8: #{tpu_custom_call.1} parent=1 // pred_region
      _
    $region9: #{tpu_custom_call.1} parent=1 // pred_fallthru
      _
    // Predicated region
    $region10: #{tpu_custom_call.1} parent=1 // pred_check
      _
    $region11: #{tpu_custom_call.1} parent=1 // pred_check_branch
      %24 = sbr.rel (0) target = $region13
    $region12: #{tpu_custom_call.1} parent=1 // pred_region
      %25 = dma.done [#allocation6], 256
    $region13: #{tpu_custom_call.1} parent=1 // pred_fallthru
      _
    %p26 = scmp.eq.s32.totalorder 0, 0
    // Predicated region
    $region14: #{tpu_custom_call.1} parent=1 // pred_check
      %p27 = pneg %p26
    $region15: #{tpu_custom_call.1} parent=1 // pred_check_branch
      %29 = sbr.rel (%p27) target = $region17
    $region16: #{tpu_custom_call.1} parent=1 // pred_region
      %vm30 = vcmask 0
      %31 = vst.msk [vmem:[#allocation2] sm:$0x1] %vm30, -inf
      %32 = vst.msk [vmem:[#allocation2 + $0x1] sm:$0x1] %vm30, -inf
      %33 = vst.msk [vmem:[#allocation3] sm:$0x1] %vm30, 0.0
      %34 = vst.msk [vmem:[#allocation3 + $0x1] sm:$0x1] %vm30, 0.0
      %vm35 = vcmask 253952
      %36 = vst.msk [vmem:[#allocation4] sm:$0x1] %vm35, 0.0
      %37 = vst.msk [vmem:[#allocation4 + $0x1] sm:$0x1] %vm35, 0.0
    $region17: #{tpu_custom_call.1} parent=1 // pred_fallthru
      _
    %v38 = vld [vmem:[#allocation5] sm:$0xff]
    %v39 = vld [vmem:[#allocation5 + $0x8] sm:$0xff]
    %v40 = vld [vmem:[%s1] sm:$0x1]
    %vm41 = vcmask 261120
    %v43 = vsel %vm41, %v40, 0
    %v46 = vsel %vm41, %v38, 0
    %48 = vmatprep.subr.mxu0 0.0
    %49 = vmatpush1.xpose.msra.mxu0 %v46
    %50 = vmatprep.subr.mxu0 0.0
    %51 = vmatpush1.xpose.msra.mxu0 0.0
    %52 = vmatprep.subr.mxu0 0.0
    %53 = vmatpush1.xpose.msra.mxu0 0.0
    %54 = vmatprep.subr.mxu0 0.0
    %55 = vmatpush1.xpose.msra.mxu0 0.0
    %56 = vmatprep.subr.mxu0 0.0
    %57 = vmatpush1.xpose.msra.mxu0 0.0
    %58 = vmatprep.subr.mxu0 0.0
    %59 = vmatpush1.xpose.msra.mxu0 0.0
    %60 = vmatprep.subr.mxu0 0.0
    %61 = vmatpush1.xpose.msra.mxu0 0.0
    %62 = vmatprep.subr.mxu0 0.0
    %63 = vmatpush1.xpose.msra.mxu0 0.0
    %64 = vmatprep.subr.mxu0 0.0
    %65 = vmatpush1.xpose.msra.mxu0 0.0
    %66 = vmatprep.subr.mxu0 0.0
    %67 = vmatpush1.xpose.msra.mxu0 0.0
    %68 = vmatprep.subr.mxu0 0.0
    %69 = vmatpush1.xpose.msra.mxu0 0.0
    %70 = vmatprep.subr.mxu0 0.0
    %71 = vmatpush1.xpose.msra.mxu0 0.0
    %72 = vmatprep.subr.mxu0 0.0
    %73 = vmatpush1.xpose.msra.mxu0 0.0
    %74 = vmatprep.subr.mxu0 0.0
    %75 = vmatpush1.xpose.msra.mxu0 0.0
    %76 = vmatprep.subr.mxu0 0.0
    %77 = vmatpush1.xpose.msra.mxu0 0.0
    %78 = vmatprep.subr.mxu0 0.0
    %79 = vmatpush1.xpose.msra.mxu0 0.0
    %80 = vmatprep.subr.mxu0 0.0
    %81 = vmatpush1.xpose.msra.mxu0 0.0
    %82 = vmatprep.subr.mxu0 0.0
    %83 = vmatpush1.xpose.msra.mxu0 0.0
    %84 = vmatprep.subr.mxu0 0.0
    %85 = vmatpush1.xpose.msra.mxu0 0.0
    %86 = vmatprep.subr.mxu0 0.0
    %87 = vmatpush1.xpose.msra.mxu0 0.0
    %88 = vmatprep.subr.mxu0 0.0
    %89 = vmatpush1.xpose.msra.mxu0 0.0
    %90 = vmatprep.subr.mxu0 0.0
    %91 = vmatpush1.xpose.msra.mxu0 0.0
    %92 = vmatprep.subr.mxu0 0.0
    %93 = vmatpush1.xpose.msra.mxu0 0.0
    %94 = vmatprep.subr.mxu0 0.0
    %95 = vmatpush1.xpose.msra.mxu0 0.0
    %96 = vmatprep.subr.mxu0 0.0
    %97 = vmatpush1.xpose.msra.mxu0 0.0
    %98 = vmatprep.subr.mxu0 0.0
    %99 = vmatpush1.xpose.msra.mxu0 0.0
    %100 = vmatprep.subr.mxu0 0.0
    %101 = vmatpush1.xpose.msra.mxu0 0.0
    %102 = vmatprep.subr.mxu0 0.0
    %103 = vmatpush1.xpose.msra.mxu0 0.0
    %104 = vmatprep.subr.mxu0 0.0
    %105 = vmatpush1.xpose.msra.mxu0 0.0
    %106 = vmatprep.subr.mxu0 0.0
    %107 = vmatpush1.xpose.msra.mxu0 0.0
    %108 = vmatprep.subr.mxu0 0.0
    %109 = vmatpush1.xpose.msra.mxu0 0.0
    %110 = vmatprep.subr.mxu0 0.0
    %111 = vmatpush1.xpose.msra.mxu0 0.0
    %112 = vmatprep.mubr.f32.mxu0 0.0
    %113 = vmatmul.mubr.f32.gmra.mrb[0].mxu0 %v43
    %v114 = vpop.f32.mrb[0].mxu0
    %v115 = vadd.f32 0.0, %v114
    %v116 = vpop.f32.mrb[0].mxu0
    %117 = vdwg.mxu0
    %v119 = vsel %vm41, %v39, 0
    %121 = vmatprep.subr.mxu0 0.0
    %122 = vmatpush1.xpose.msra.mxu0 %v119
    %123 = vmatprep.subr.mxu0 0.0
    %124 = vmatpush1.xpose.msra.mxu0 0.0
    %125 = vmatprep.subr.mxu0 0.0
    %126 = vmatpush1.xpose.msra.mxu0 0.0
    %127 = vmatprep.subr.mxu0 0.0
    %128 = vmatpush1.xpose.msra.mxu0 0.0
    %129 = vmatprep.subr.mxu0 0.0
    %130 = vmatpush1.xpose.msra.mxu0 0.0
    %131 = vmatprep.subr.mxu0 0.0
    %132 = vmatpush1.xpose.msra.mxu0 0.0
    %133 = vmatprep.subr.mxu0 0.0
    %134 = vmatpush1.xpose.msra.mxu0 0.0
    %135 = vmatprep.subr.mxu0 0.0
    %136 = vmatpush1.xpose.msra.mxu0 0.0
    %137 = vmatprep.subr.mxu0 0.0
    %138 = vmatpush1.xpose.msra.mxu0 0.0
    %139 = vmatprep.subr.mxu0 0.0
    %140 = vmatpush1.xpose.msra.mxu0 0.0
    %141 = vmatprep.subr.mxu0 0.0
    %142 = vmatpush1.xpose.msra.mxu0 0.0
    %143 = vmatprep.subr.mxu0 0.0
    %144 = vmatpush1.xpose.msra.mxu0 0.0
    %145 = vmatprep.subr.mxu0 0.0
    %146 = vmatpush1.xpose.msra.mxu0 0.0
    %147 = vmatprep.subr.mxu0 0.0
    %148 = vmatpush1.xpose.msra.mxu0 0.0
    %149 = vmatprep.subr.mxu0 0.0
    %150 = vmatpush1.xpose.msra.mxu0 0.0
    %151 = vmatprep.subr.mxu0 0.0
    %152 = vmatpush1.xpose.msra.mxu0 0.0
    %153 = vmatprep.subr.mxu0 0.0
    %154 = vmatpush1.xpose.msra.mxu0 0.0
    %155 = vmatprep.subr.mxu0 0.0
    %156 = vmatpush1.xpose.msra.mxu0 0.0
    %157 = vmatprep.subr.mxu0 0.0
    %158 = vmatpush1.xpose.msra.mxu0 0.0
    %159 = vmatprep.subr.mxu0 0.0
    %160 = vmatpush1.xpose.msra.mxu0 0.0
    %161 = vmatprep.subr.mxu0 0.0
    %162 = vmatpush1.xpose.msra.mxu0 0.0
    %163 = vmatprep.subr.mxu0 0.0
    %164 = vmatpush1.xpose.msra.mxu0 0.0
    %165 = vmatprep.subr.mxu0 0.0
    %166 = vmatpush1.xpose.msra.mxu0 0.0
    %167 = vmatprep.subr.mxu0 0.0
    %168 = vmatpush1.xpose.msra.mxu0 0.0
    %169 = vmatprep.subr.mxu0 0.0
    %170 = vmatpush1.xpose.msra.mxu0 0.0
    %171 = vmatprep.subr.mxu0 0.0
    %172 = vmatpush1.xpose.msra.mxu0 0.0
    %173 = vmatprep.subr.mxu0 0.0
    %174 = vmatpush1.xpose.msra.mxu0 0.0
    %175 = vmatprep.subr.mxu0 0.0
    %176 = vmatpush1.xpose.msra.mxu0 0.0
    %177 = vmatprep.subr.mxu0 0.0
    %178 = vmatpush1.xpose.msra.mxu0 0.0
    %179 = vmatprep.subr.mxu0 0.0
    %180 = vmatpush1.xpose.msra.mxu0 0.0
    %181 = vmatprep.subr.mxu0 0.0
    %182 = vmatpush1.xpose.msra.mxu0 0.0
    %183 = vmatprep.subr.mxu0 0.0
    %184 = vmatpush1.xpose.msra.mxu0 0.0
    %185 = vmatprep.mubr.f32.mxu0 0.0
    %186 = vmatmul.mubr.f32.gmra.mrb[0].mxu0 %v43
    %v187 = vpop.f32.mrb[0].mxu0
    %v188 = vadd.f32 0.0, %v187
    %v189 = vpop.f32.mrb[0].mxu0
    %190 = vdwg.mxu0
    %v191 = vld [vmem:[#allocation2] sm:$0x1]
    %v192 = vld [vmem:[#allocation2 + $0x1] sm:$0x1]
    %vm193 = vcmask 57344
    %v194 = vsel %vm193, %v115, -inf
    %195 = vmax.xlane.f32.xlu0 %v194
    %v196 = vpop.xlane.xlu0 %195
    %v197 = vsel %vm193, %v188, -inf
    %198 = vmax.xlane.f32.xlu0 %v197
    %v199 = vpop.xlane.xlu0 %198
    %v200 = vmax.f32 %v191, %v196
    %v201 = vmax.f32 %v192, %v199
    %v202 = vsub.f32 %v191, %v200
    %v203 = vsub.f32 %v192, %v201
    %v204 = vmul.f32 %v202, 1.442695
    %v205 = vpow.pop %v204
    %v206 = vmul.f32 %v203, 1.442695
    %v207 = vpow.pop %v206
    %209 = vset.pattern.permute.xlu0 0
    %210 = vperm.xlu0 %209, %v200
    %v211 = vpop.permute.xlu0 %210
    %v213 = vlaneseq
    %v214 = vshrl.u32 %v213, 7
    %v215 = vsub.s32 0, %v214
    %v216 = vrot.slane %v211, %v215
    %218 = vset.pattern.permute.xlu0 0
    %219 = vperm.xlu0 %218, %v201
    %v220 = vpop.permute.xlu0 %219
    %v222 = vlaneseq
    %v223 = vshrl.u32 %v222, 7
    %v224 = vsub.s32 0, %v223
    %v225 = vrot.slane %v220, %v224
    %v226 = vsub.f32 %v115, %v216
    %v227 = vsub.f32 %v188, %v225
    %v228 = vmul.f32 %v226, 1.442695
    %v229 = vpow.pop %v228
    %v230 = vmul.f32 %v227, 1.442695
    %v231 = vpow.pop %v230
    %v232 = vld [vmem:[#allocation3] sm:$0x1]
    %v233 = vld [vmem:[#allocation3 + $0x1] sm:$0x1]
    %v234 = vmul.f32 %v205, %v232
    %v235 = vmul.f32 %v207, %v233
    %v236 = vsel %vm193, %v229, 0.0
    %237 = vadd.xlane.f32.xlu0 %v236
    %v238 = vpop.xlane.xlu0 %237
    %v239 = vsel %vm193, %v231, 0.0
    %240 = vadd.xlane.f32.xlu0 %v239
    %v241 = vpop.xlane.xlu0 %240
    %v242 = vadd.f32 %v234, %v238
    %v243 = vadd.f32 %v235, %v241
    %vm244 = vcmask 0
    %245 = vst.msk [vmem:[#allocation3] sm:$0x1] %vm244, %v242
    %246 = vst.msk [vmem:[#allocation3 + $0x1] sm:$0x1] %vm244, %v243
    %v247 = vld [vmem:[#allocation4] sm:$0x1]
    %v248 = vld [vmem:[#allocation4 + $0x1] sm:$0x1]
    %250 = vset.pattern.permute.xlu0 0
    %251 = vperm.xlu0 %250, %v205
    %v252 = vpop.permute.xlu0 %251
    %v254 = vlaneseq
    %v255 = vshrl.u32 %v254, 7
    %v256 = vsub.s32 0, %v255
    %v257 = vrot.slane %v252, %v256
    %259 = vset.pattern.permute.xlu0 0
    %260 = vperm.xlu0 %259, %v207
    %v261 = vpop.permute.xlu0 %260
    %v263 = vlaneseq
    %v264 = vshrl.u32 %v263, 7
    %v265 = vsub.s32 0, %v264
    %v266 = vrot.slane %v261, %v265
    %v267 = vmul.f32 %v257, %v247
    %v268 = vmul.f32 %v266, %v248
    %vm269 = vcmask 64512
    %v271 = vsel %vm269, %v229, 0
    %273 = vmatprep.subr.mxu0 0.0
    %274 = vmatpush1.msra.mxu0 %v38
    %275 = vmatprep.subr.mxu0 0.0
    %276 = vmatpush1.msra.mxu0 0.0
    %277 = vmatprep.subr.mxu0 0.0
    %278 = vmatpush1.msra.mxu0 0.0
    %279 = vmatprep.subr.mxu0 0.0
    %280 = vmatpush1.msra.mxu0 0.0
    %281 = vmatprep.subr.mxu0 0.0
    %282 = vmatpush1.msra.mxu0 0.0
    %283 = vmatprep.subr.mxu0 0.0
    %284 = vmatpush1.msra.mxu0 0.0
    %285 = vmatprep.subr.mxu0 0.0
    %286 = vmatpush1.msra.mxu0 0.0
    %287 = vmatprep.subr.mxu0 0.0
    %288 = vmatpush1.msra.mxu0 0.0
    %289 = vmatprep.subr.mxu0 0.0
    %290 = vmatpush1.msra.mxu0 0.0
    %291 = vmatprep.subr.mxu0 0.0
    %292 = vmatpush1.msra.mxu0 0.0
    %293 = vmatprep.subr.mxu0 0.0
    %294 = vmatpush1.msra.mxu0 0.0
    %295 = vmatprep.subr.mxu0 0.0
    %296 = vmatpush1.msra.mxu0 0.0
    %297 = vmatprep.subr.mxu0 0.0
    %298 = vmatpush1.msra.mxu0 0.0
    %299 = vmatprep.subr.mxu0 0.0
    %300 = vmatpush1.msra.mxu0 0.0
    %301 = vmatprep.subr.mxu0 0.0
    %302 = vmatpush1.msra.mxu0 0.0
    %303 = vmatprep.subr.mxu0 0.0
    %304 = vmatpush1.msra.mxu0 0.0
    %305 = vmatprep.subr.mxu0 0.0
    %306 = vmatpush1.msra.mxu0 0.0
    %307 = vmatprep.subr.mxu0 0.0
    %308 = vmatpush1.msra.mxu0 0.0
    %309 = vmatprep.subr.mxu0 0.0
    %310 = vmatpush1.msra.mxu0 0.0
    %311 = vmatprep.subr.mxu0 0.0
    %312 = vmatpush1.msra.mxu0 0.0
    %313 = vmatprep.subr.mxu0 0.0
    %314 = vmatpush1.msra.mxu0 0.0
    %315 = vmatprep.subr.mxu0 0.0
    %316 = vmatpush1.msra.mxu0 0.0
    %317 = vmatprep.subr.mxu0 0.0
    %318 = vmatpush1.msra.mxu0 0.0
    %319 = vmatprep.subr.mxu0 0.0
    %320 = vmatpush1.msra.mxu0 0.0
    %321 = vmatprep.subr.mxu0 0.0
    %322 = vmatpush1.msra.mxu0 0.0
    %323 = vmatprep.subr.mxu0 0.0
    %324 = vmatpush1.msra.mxu0 0.0
    %325 = vmatprep.subr.mxu0 0.0
    %326 = vmatpush1.msra.mxu0 0.0
    %327 = vmatprep.subr.mxu0 0.0
    %328 = vmatpush1.msra.mxu0 0.0
    %329 = vmatprep.subr.mxu0 0.0
    %330 = vmatpush1.msra.mxu0 0.0
    %331 = vmatprep.subr.mxu0 0.0
    %332 = vmatpush1.msra.mxu0 0.0
    %333 = vmatprep.subr.mxu0 0.0
    %334 = vmatpush1.msra.mxu0 0.0
    %335 = vmatprep.subr.mxu0 0.0
    %336 = vmatpush1.msra.mxu0 0.0
    %337 = vmatprep.mubr.f32.mxu0 0.0
    %338 = vmatmul.mubr.f32.gmra.mrb[0].mxu0 %v271
    %v339 = vpop.f32.mrb[0].mxu0
    %v340 = vadd.f32 0.0, %v339
    %v341 = vpop.f32.mrb[0].mxu0
    %342 = vdwg.mxu0
    %v344 = vsel %vm269, %v231, 0
    %346 = vmatprep.subr.mxu0 0.0
    %347 = vmatpush1.msra.mxu0 %v39
    %348 = vmatprep.subr.mxu0 0.0
    %349 = vmatpush1.msra.mxu0 0.0
    %350 = vmatprep.subr.mxu0 0.0
    %351 = vmatpush1.msra.mxu0 0.0
    %352 = vmatprep.subr.mxu0 0.0
    %353 = vmatpush1.msra.mxu0 0.0
    %354 = vmatprep.subr.mxu0 0.0
    %355 = vmatpush1.msra.mxu0 0.0
    %356 = vmatprep.subr.mxu0 0.0
    %357 = vmatpush1.msra.mxu0 0.0
    %358 = vmatprep.subr.mxu0 0.0
    %359 = vmatpush1.msra.mxu0 0.0
    %360 = vmatprep.subr.mxu0 0.0
    %361 = vmatpush1.msra.mxu0 0.0
    %362 = vmatprep.subr.mxu0 0.0
    %363 = vmatpush1.msra.mxu0 0.0
    %364 = vmatprep.subr.mxu0 0.0
    %365 = vmatpush1.msra.mxu0 0.0
    %366 = vmatprep.subr.mxu0 0.0
    %367 = vmatpush1.msra.mxu0 0.0
    %368 = vmatprep.subr.mxu0 0.0
    %369 = vmatpush1.msra.mxu0 0.0
    %370 = vmatprep.subr.mxu0 0.0
    %371 = vmatpush1.msra.mxu0 0.0
    %372 = vmatprep.subr.mxu0 0.0
    %373 = vmatpush1.msra.mxu0 0.0
    %374 = vmatprep.subr.mxu0 0.0
    %375 = vmatpush1.msra.mxu0 0.0
    %376 = vmatprep.subr.mxu0 0.0
    %377 = vmatpush1.msra.mxu0 0.0
    %378 = vmatprep.subr.mxu0 0.0
    %379 = vmatpush1.msra.mxu0 0.0
    %380 = vmatprep.subr.mxu0 0.0
    %381 = vmatpush1.msra.mxu0 0.0
    %382 = vmatprep.subr.mxu0 0.0
    %383 = vmatpush1.msra.mxu0 0.0
    %384 = vmatprep.subr.mxu0 0.0
    %385 = vmatpush1.msra.mxu0 0.0
    %386 = vmatprep.subr.mxu0 0.0
    %387 = vmatpush1.msra.mxu0 0.0
    %388 = vmatprep.subr.mxu0 0.0
    %389 = vmatpush1.msra.mxu0 0.0
    %390 = vmatprep.subr.mxu0 0.0
    %391 = vmatpush1.msra.mxu0 0.0
    %392 = vmatprep.subr.mxu0 0.0
    %393 = vmatpush1.msra.mxu0 0.0
    %394 = vmatprep.subr.mxu0 0.0
    %395 = vmatpush1.msra.mxu0 0.0
    %396 = vmatprep.subr.mxu0 0.0
    %397 = vmatpush1.msra.mxu0 0.0
    %398 = vmatprep.subr.mxu0 0.0
    %399 = vmatpush1.msra.mxu0 0.0
    %400 = vmatprep.subr.mxu0 0.0
    %401 = vmatpush1.msra.mxu0 0.0
    %402 = vmatprep.subr.mxu0 0.0
    %403 = vmatpush1.msra.mxu0 0.0
    %404 = vmatprep.subr.mxu0 0.0
    %405 = vmatpush1.msra.mxu0 0.0
    %406 = vmatprep.subr.mxu0 0.0
    %407 = vmatpush1.msra.mxu0 0.0
    %408 = vmatprep.subr.mxu0 0.0
    %409 = vmatpush1.msra.mxu0 0.0
    %410 = vmatprep.mubr.f32.mxu0 0.0
    %411 = vmatmul.mubr.f32.gmra.mrb[0].mxu0 %v344
    %v412 = vpop.f32.mrb[0].mxu0
    %v413 = vadd.f32 0.0, %v412
    %v414 = vpop.f32.mrb[0].mxu0
    %415 = vdwg.mxu0
    %v416 = vadd.f32 %v267, %v340
    %v417 = vadd.f32 %v268, %v413
    %vm418 = vcmask 253952
    %419 = vst.msk [vmem:[#allocation4] sm:$0x1] %vm418, %v416
    %420 = vst.msk [vmem:[#allocation4 + $0x1] sm:$0x1] %vm418, %v417
    %421 = vst.msk [vmem:[#allocation2] sm:$0x1] %vm244, %v200
    %422 = vst.msk [vmem:[#allocation2 + $0x1] sm:$0x1] %vm244, %v201
    // Predicated region
    $region18: #{tpu_custom_call.1} parent=1 // pred_check
      %p423 = pneg %p26
    $region19: #{tpu_custom_call.1} parent=1 // pred_check_branch
      %425 = sbr.rel (%p423) target = $region21
    $region20: #{tpu_custom_call.1} parent=1 // pred_region
      %v426 = vld [vmem:[#allocation3] sm:$0x1]
      %v427 = vld [vmem:[#allocation3 + $0x1] sm:$0x1]
      %v428 = vrcp.pop %v426
      %v429 = vrcp.pop %v427
      %v430 = vld [vmem:[#allocation4] sm:$0x1]
      %v431 = vld [vmem:[#allocation4 + $0x1] sm:$0x1]
      %433 = vset.pattern.permute.xlu0 0
      %434 = vperm.xlu0 %433, %v428
      %v435 = vpop.permute.xlu0 %434
      %v437 = vlaneseq
      %v438 = vshrl.u32 %v437, 7
      %v439 = vsub.s32 0, %v438
      %v440 = vrot.slane %v435, %v439
      %442 = vset.pattern.permute.xlu0 0
      %443 = vperm.xlu0 %442, %v429
      %v444 = vpop.permute.xlu0 %443
      %v446 = vlaneseq
      %v447 = vshrl.u32 %v446, 7
      %v448 = vsub.s32 0, %v447
      %v449 = vrot.slane %v444, %v448
      %v450 = vmul.f32 %v430, %v440
      %v451 = vmul.f32 %v431, %v449
      %452 = vst.msk [vmem:[#allocation8] sm:$0x1] %vm418, %v450
      %453 = vst.msk [vmem:[#allocation8 + $0x1] sm:$0x1] %vm418, %v451
    $region21: #{tpu_custom_call.1} parent=1 // pred_fallthru
      _
    // Predicated region
    $region22: #{tpu_custom_call.1} parent=1 // pred_check
      _
    $region23: #{tpu_custom_call.1} parent=1 // pred_check_branch
      %455 = sbr.rel (0) target = $region25
    $region24: #{tpu_custom_call.1} parent=1 // pred_region
      %s457 = ssub.s32 32, 32
      %458 = vsyncadd [#allocation7], %s457
      %s459 = sshll.u32 [#allocation8], 4
      %s460 = int_to_ptr.vmem [resolvable:$true] %s459
      %465 = dma.vmem_to_hbm [thread:$0]  %s460, 32, %s2, [#allocation7], 16, 16, 1
    $region25: #{tpu_custom_call.1} parent=1 // pred_fallthru
      _
    // Predicated region
    $region26: #{tpu_custom_call.1} parent=1 // pred_check
      _
    $region27: #{tpu_custom_call.1} parent=1 // pred_check_branch
      %467 = sbr.rel (0) target = $region29
    $region28: #{tpu_custom_call.1} parent=1 // pred_region
      %468 = dma.done [#allocation7], 32
    $region29: #{tpu_custom_call.1} parent=1 // pred_fallthru
      _
    %469 = vsyncpa [#allocation6], 1
    %470 = vsyncpa [#allocation7], 1

</llo_original>
